<compile_context>
chip_gen: v7x
topology: tpu7x:2x2x1
jax: 0.10.0
libtpu: 0.0.40
codegen_flags: <defaults>
</compile_context>

<pallas_src>
import functools

import jax
import jax.numpy as jnp
import numpy as np
from jax.experimental import pallas as pl
from jax.experimental.pallas import tpu as pltpu


# ------------------------------ small helpers -------------------------------

def _round_up(x, m):
    return (x + m - 1) // m * m


def _padded_vmem_bytes(shape, dtype):
    """VMEM bytes of one buffer, accounting for (sublane, 128) tile padding."""
    itemsize = jnp.dtype(dtype).itemsize
    sublane = 8 * max(1, 4 // itemsize)          # 8 rows (f32) / 16 rows (bf16)
    s = [int(d) for d in shape]
    if not s:
        return itemsize
    s[-1] = _round_up(s[-1], 128)
    if len(s) >= 2:
        s[-2] = _round_up(s[-2], sublane)
    n = 1
    for d in s:
        n *= d
    return n * itemsize


def _pick_rows_per_block(n, h, w, max_lanes=512):
    """Whole low-res rows per block (so the matching high-res window is contiguous
    in NCHW).  Prefer a lane-dense block (rb*W % 128 == 0), as large as possible
    up to max_lanes, keeping the grid >= 2 where we can (v7x megacore)."""
    best = None
    for rb in range(1, h + 1):
        if h % rb:
            continue
        lanes = rb * w
        if lanes % 128 or lanes > max_lanes:
            continue
        if n == 1 and rb == h and best is not None:
            continue                              # keep >= 2 grid steps if possible
        best = rb
    if best is not None:
        return best
    if h * w <= max_lanes:                        # whole image per block: lane dim
        return h                                  # equals the full array dim (legal)
    # TODO(synk): add a ragged-lane / padded-W path for (H, W) that cannot be
    # tiled into 128-aligned whole-row blocks.
    raise NotImplementedError(f"no lane-aligned row blocking for H={h}, W={w}")


def _upsample_matrix(rb, w, dtype=jnp.bfloat16):
    """U[p, q] = 1 iff high-res lane q (flattened row-major over (2*rb, 2*w))
    has low-res parent lane p (flattened over (rb, w)).  base @ U is an exact
    nearest 2x2 upsample along the flattened-spatial lane axis."""
    L = rb * w
    p = np.arange(L)
    q = np.arange(4 * L)
    pr, pj = p // w, p % w
    qr, qj = q // (2 * w), q % (2 * w)
    u = (pr[:, None] == (qr[None, :] // 2)) & (pj[:, None] == (qj[None, :] // 2))
    return jnp.asarray(u.astype(np.float32), dtype=dtype)


def _fold_bn(conv_bias, gamma, beta, mean, var, eps=1e-5):
    scale = gamma / jnp.sqrt(var + eps)
    bias = beta + scale * (conv_bias - mean)
    return scale, bias


# ----------------------------- Pallas kernel -------------------------------

def _combine_kernel(lo_ref, hi_ref, w1t_ref, b1_ref, w2at_ref, w2bt_ref,
                    b2_ref, u_ref, o_ref):
    # lo_ref : (1, Cin,   L )  low-res pixels (RB whole rows), spatial on lanes
    # hi_ref : (1, Chalf, 4L)  matching high-res skip window (contiguous in NCHW)
    # o_ref  : (1, F,     4L)
    lo = lo_ref[0]                                              # (Cin, L) bf16

    # 1x1 conv (Cin -> Cin//2) with BN1 scale folded into the weight; BN1 bias
    # and relu in f32.  Computed once per LOW-res pixel.
    y1 = jnp.dot(w1t_ref[...], lo, preferred_element_type=jnp.float32)
    y1 = jnp.maximum(y1 + b1_ref[...], 0.0).astype(jnp.bfloat16)  # (Chalf, L)

    # Up-branch contribution of conv2 (+ BN2 bias), still at low resolution.
    base = jnp.dot(w2at_ref[...], y1, preferred_element_type=jnp.float32)
    base = (base + b2_ref[...]).astype(jnp.bfloat16)              # (F, L)

    # Nearest 2x2 upsample along the flattened-spatial lane axis, expressed as a
    # matmul with a constant one-hot replication matrix (MXU slack is ample in
    # this HBM-bound kernel, and it lowers robustly).
    base_up = jnp.dot(base, u_ref[...],
                      preferred_element_type=jnp.float32)         # (F, 4L)

    # Skip-branch contribution of conv2 at high resolution.
    hic = jnp.dot(w2bt_ref[...], hi_ref[0],
                  preferred_element_type=jnp.float32)             # (F, 4L)

    # One full-width, lane-dense store.
    o_ref[0] = (base_up + hic).astype(o_ref.dtype)


def _combine_pallas(lo3, hi3, w1t, b1, w2at, w2bt, b2, u, *, lanes, out_dtype):
    n, cin, hw = lo3.shape
    _, chalf, hw4 = hi3.shape
    f = w2at.shape[0]
    assert hw % lanes == 0 and hw4 == 4 * hw
    nblk = hw // lanes
    L, L4 = lanes, 4 * lanes

    full = lambda b, r: (0, 0)

    # Padding-aware VMEM footprint (double-buffered blocks + resident weights).
    est = 2 * (_padded_vmem_bytes((cin, L), lo3.dtype)
               + _padded_vmem_bytes((chalf, L4), hi3.dtype)
               + _padded_vmem_bytes((f, L4), out_dtype))
    for arr in (w1t, b1, w2at, w2bt, b2, u):
        est += 2 * _padded_vmem_bytes(arr.shape, arr.dtype)

    try:
        vmem_cap = int(pltpu.get_tpu_info().vmem_capacity_bytes)
    except Exception:
        vmem_cap = 64 << 20                       # assume the smallest (v7x per-TC)
    cap = (40 << 20) if vmem_cap <= (64 << 20) else (96 << 20)
    vmem_limit = int(min(cap, max(16 << 20, 2 * est + (4 << 20))))

    return pl.pallas_call(
        _combine_kernel,
        out_shape=jax.ShapeDtypeStruct((n, f, 4 * hw), out_dtype),
        grid_spec=pltpu.PrefetchScalarGridSpec(
            num_scalar_prefetch=0,
            grid=(n, nblk),
            in_specs=[
                pl.BlockSpec((1, cin, L), lambda b, r: (b, 0, r)),    # lo (NCHW)
                pl.BlockSpec((1, chalf, L4), lambda b, r: (b, 0, r)),  # hi (NCHW)
                pl.BlockSpec(w1t.shape, full),                         # W1^T * s1
                pl.BlockSpec(b1.shape, full),                          # BN1 bias
                pl.BlockSpec(w2at.shape, full),                        # W2a^T * s2
                pl.BlockSpec(w2bt.shape, full),                        # W2b^T * s2
                pl.BlockSpec(b2.shape, full),                          # BN2 bias
                pl.BlockSpec(u.shape, full),                           # upsample U
            ],
            out_specs=pl.BlockSpec((1, f, L4), lambda b, r: (b, 0, r)),
        ),
        compiler_params=pltpu.CompilerParams(
            dimension_semantics=("parallel", "parallel"),
            vmem_limit_bytes=vmem_limit,
        ),
    )(lo3, hi3, w1t, b1, w2at, w2bt, b2, u)


@functools.partial(jax.jit, static_argnames=("rb", "out_dtype"))
def _combine_forward(lo, hi, w1t, b1, w2at, w2bt, b2, *, rb, out_dtype):
    n, cin, h, w = lo.shape
    chalf = hi.shape[1]
    f = w2at.shape[0]
    u = _upsample_matrix(rb, w, dtype=w1t.dtype)
    # Free reshapes only: NCHW stays NCHW, spatial just flattens onto lanes.
    lo3 = lo.reshape(n, cin, h * w)
    hi3 = hi.reshape(n, chalf, 4 * h * w)
    out3 = _combine_pallas(lo3, hi3, w1t, b1, w2at, w2bt, b2, u,
                           lanes=rb * w, out_dtype=out_dtype)
    return out3.reshape(n, f, 2 * h, 2 * w)


# ----------------------------- Module wrapper -------------------------------

class CombineLayersPallas:
    """JAX/Pallas port of CEECNET CombineLayers (BatchNorm in eval mode)."""

    def __init__(self, in_channels, nfilters, key, *, compute_dtype=jnp.bfloat16):
        assert in_channels % 2 == 0
        self.cin = in_channels
        self.chalf = in_channels // 2
        self.f = nfilters
        self.compute_dtype = compute_dtype

        k1, k2 = jax.random.split(key)
        # (in, out) weight layout for the 1x1 convs.
        self.w1 = (jax.random.normal(k1, (self.cin, self.chalf), jnp.float32)
                   * (1.0 / np.sqrt(self.cin)))
        self.b1_conv = jnp.linspace(-0.1, 0.1, self.chalf, dtype=jnp.float32)
        self.w2 = (jax.random.normal(k2, (self.cin, self.f), jnp.float32)
                   * (1.0 / np.sqrt(self.cin)))
        self.b2_conv = jnp.linspace(-0.05, 0.05, self.f, dtype=jnp.float32)

        # deterministic inference-mode BatchNorm parameters
        self.g1 = 1.0 + 0.05 * jnp.arange(self.chalf, dtype=jnp.float32)
        self.be1 = 0.01 * jnp.arange(self.chalf, dtype=jnp.float32)
        self.m1 = 0.02 * jnp.arange(self.chalf, dtype=jnp.float32)
        self.v1 = 1.0 + 0.1 * jnp.arange(self.chalf, dtype=jnp.float32)
        self.g2 = 1.0 + 0.03 * jnp.arange(self.f, dtype=jnp.float32)
        self.be2 = -0.02 * jnp.arange(self.f, dtype=jnp.float32)
        self.m2 = 0.01 * jnp.arange(self.f, dtype=jnp.float32)
        self.v2 = 1.0 + 0.05 * jnp.arange(self.f, dtype=jnp.float32)
        # TODO(synk): training-mode BatchNorm (batch statistics + running-stat
        # updates) is not implemented; this is the eval-mode forward pass.

    def _folded_params(self, dtype):
        s1, b1 = _fold_bn(self.b1_conv, self.g1, self.be1, self.m1, self.v1)
        s2, b2 = _fold_bn(self.b2_conv, self.g2, self.be2, self.m2, self.v2)
        w1t = (self.w1 * s1[None, :]).T.astype(dtype)                 # (Chalf, Cin)
        w2at = (self.w2[:self.chalf] * s2[None, :]).T.astype(dtype)   # (F, Chalf)
        w2bt = (self.w2[self.chalf:] * s2[None, :]).T.astype(dtype)   # (F, Chalf)
        # Biases stay f32 (added after the f32 MXU accumulation), as lane-broadcast
        # column vectors.
        return w1t, b1.reshape(-1, 1), w2at, w2bt, b2.reshape(-1, 1)

    def __call__(self, layer_lo_nchw, layer_hi_nchw, *, max_lanes=512):
        # layer_lo: (N, Cin, H, W); layer_hi: (N, Cin//2, 2H, 2W); both NCHW.
        n, cin, h, w = layer_lo_nchw.shape
        assert cin == self.cin
        assert layer_hi_nchw.shape == (n, self.chalf, 2 * h, 2 * w)

        # bf16 halves HBM bytes and hits the native MXU path; ideally the caller
        # already keeps activations in bf16 so the cast is a no-op.
        lo = layer_lo_nchw.astype(self.compute_dtype)
        hi = layer_hi_nchw.astype(self.compute_dtype)
        w1t, b1, w2at, w2bt, b2 = self._folded_params(self.compute_dtype)

        rb = _pick_rows_per_block(n, h, w, max_lanes=max_lanes)
        return _combine_forward(lo, hi, w1t, b1, w2at, w2bt, b2,
                                rb=rb, out_dtype=self.compute_dtype)

    # Pure-JAX f32 reference mirroring the PyTorch eval forward exactly
    # (explicit nearest upsample, un-folded BatchNorm, channel concat).
    def reference(self, layer_lo_nchw, layer_hi_nchw, eps=1e-5):
        lo_up = jnp.repeat(jnp.repeat(layer_lo_nchw.astype(jnp.float32),
                                      2, axis=2), 2, axis=3)
        lo = jnp.transpose(lo_up, (0, 2, 3, 1))                    # NHWC
        hi = jnp.transpose(layer_hi_nchw.astype(jnp.float32), (0, 2, 3, 1))
        z1 = lo @ self.w1 + self.b1_conv
        z1 = self.g1 * (z1 - self.m1) / jnp.sqrt(self.v1 + eps) + self.be1
        y1 = jnp.maximum(z1, 0.0)
        x = jnp.concatenate([y1, hi], axis=-1)
        z2 = x @ self.w2 + self.b2_conv
        z2 = self.g2 * (z2 - self.m2) / jnp.sqrt(self.v2 + eps) + self.be2
        return jnp.transpose(z2, (0, 3, 1, 2))                     # NCHW


# ----------------------------------- main -----------------------------------

if __name__ == "__main__":
    key = jax.random.PRNGKey(0)
    k_lo, k_hi, k_params = jax.random.split(key, 3)

    N, CIN, H, W = 2, 8, 8, 8
    NFILTERS = 16

    layer_lo = jax.random.normal(k_lo, (N, CIN, H, W),
                                 jnp.float32).astype(jnp.bfloat16)
    layer_hi = jax.random.normal(k_hi, (N, CIN // 2, 2 * H, 2 * W),
                                 jnp.float32).astype(jnp.bfloat16)

    module = CombineLayersPallas(CIN, NFILTERS, k_params)

    out = module(layer_lo, layer_hi)
    out = jax.block_until_ready(out)
    assert out.shape == (N, NFILTERS, 2 * H, 2 * W)

    ref = module.reference(layer_lo, layer_hi)
    np.testing.assert_allclose(np.asarray(out.astype(jnp.float32)),
                               np.asarray(ref),
                               rtol=2e-2, atol=2e-2)

    print("KERNEL_OK")
</pallas_src>

<mosaic_0001>
module attributes {stable_mosaic.version = 11 : i64} {
  func.func @_combine_kernel(%arg0: i32, %arg1: i32, %arg2: memref<1x8x64xbf16, #tpu.memory_space<vmem>>, %arg3: memref<1x4x256xbf16, #tpu.memory_space<vmem>>, %arg4: memref<4x8xbf16, #tpu.memory_space<vmem>>, %arg5: memref<4x1xf32, #tpu.memory_space<vmem>>, %arg6: memref<16x4xbf16, #tpu.memory_space<vmem>>, %arg7: memref<16x4xbf16, #tpu.memory_space<vmem>>, %arg8: memref<16x1xf32, #tpu.memory_space<vmem>>, %arg9: memref<64x256xbf16, #tpu.memory_space<vmem>>, %arg10: memref<1x16x256xbf16, #tpu.memory_space<vmem>>) attributes {dimension_semantics = [#tpu.dimension_semantics<parallel>, #tpu.dimension_semantics<parallel>], iteration_bounds = array<i64: 2, 1>, scalar_prefetch = 0 : i64, scratch_operands = 0 : i64, tpu.core_type = #tpu.core_type<tc>, window_params = [{transform_indices = @transform_0, window_bounds = array<i64: 1, 8, 64>}, {transform_indices = @transform_1, window_bounds = array<i64: 1, 4, 256>}, {pipeline_mode = #tpu.pipeline_mode<synchronous>, transform_indices = @transform_2, window_bounds = array<i64: 4, 8>}, {pipeline_mode = #tpu.pipeline_mode<synchronous>, transform_indices = @transform_3, window_bounds = array<i64: 4, 1>}, {pipeline_mode = #tpu.pipeline_mode<synchronous>, transform_indices = @transform_4, window_bounds = array<i64: 16, 4>}, {pipeline_mode = #tpu.pipeline_mode<synchronous>, transform_indices = @transform_5, window_bounds = array<i64: 16, 4>}, {pipeline_mode = #tpu.pipeline_mode<synchronous>, transform_indices = @transform_6, window_bounds = array<i64: 16, 1>}, {pipeline_mode = #tpu.pipeline_mode<synchronous>, transform_indices = @transform_7, window_bounds = array<i64: 64, 256>}, {transform_indices = @transform_8, window_bounds = array<i64: 1, 16, 256>}]} {
    %c0 = arith.constant 0 : index
    %c0_0 = arith.constant 0 : index
    %c0_1 = arith.constant 0 : index
    %0 = vector.load %arg2[%c0, %c0_0, %c0_1] : memref<1x8x64xbf16, #tpu.memory_space<vmem>>, vector<1x8x64xbf16>
    %1 = vector.shape_cast %0 : vector<1x8x64xbf16> to vector<8x64xbf16>
    %c0_2 = arith.constant 0 : index
    %c0_3 = arith.constant 0 : index
    %2 = vector.load %arg4[%c0_2, %c0_3] : memref<4x8xbf16, #tpu.memory_space<vmem>>, vector<4x8xbf16>
    %cst = arith.constant dense<0.000000e+00> : vector<4x64xf32>
    %3 = tpu.matmul %2, %1, %cst {dimension_numbers = #tpu.dot_dimension_numbers<[1], [0], [0], [1], [0, 0, 1, 1], [], []>} : vector<4x8xbf16>, vector<8x64xbf16>, vector<4x64xf32> -> vector<4x64xf32>
    %c0_4 = arith.constant 0 : index
    %c0_5 = arith.constant 0 : index
    %4 = vector.load %arg5[%c0_4, %c0_5] : memref<4x1xf32, #tpu.memory_space<vmem>>, vector<4x1xf32>
    %5 = vector.broadcast %4 : vector<4x1xf32> to vector<4x64xf32>
    %6 = arith.addf %3, %5 : vector<4x64xf32>
    %cst_6 = arith.constant 0.000000e+00 : f32
    %7 = vector.broadcast %cst_6 : f32 to vector<4x64xf32>
    %8 = arith.maximumf %6, %7 : vector<4x64xf32>
    %9 = arith.truncf %8 : vector<4x64xf32> to vector<4x64xbf16>
    %c0_7 = arith.constant 0 : index
    %c0_8 = arith.constant 0 : index
    %10 = vector.load %arg6[%c0_7, %c0_8] : memref<16x4xbf16, #tpu.memory_space<vmem>>, vector<16x4xbf16>
    %cst_9 = arith.constant dense<0.000000e+00> : vector<16x64xf32>
    %11 = tpu.matmul %10, %9, %cst_9 {dimension_numbers = #tpu.dot_dimension_numbers<[1], [0], [0], [1], [0, 0, 1, 1], [], []>} : vector<16x4xbf16>, vector<4x64xbf16>, vector<16x64xf32> -> vector<16x64xf32>
    %c0_10 = arith.constant 0 : index
    %c0_11 = arith.constant 0 : index
    %12 = vector.load %arg8[%c0_10, %c0_11] : memref<16x1xf32, #tpu.memory_space<vmem>>, vector<16x1xf32>
    %13 = vector.broadcast %12 : vector<16x1xf32> to vector<16x64xf32>
    %14 = arith.addf %11, %13 : vector<16x64xf32>
    %15 = arith.truncf %14 : vector<16x64xf32> to vector<16x64xbf16>
    %c0_12 = arith.constant 0 : index
    %c0_13 = arith.constant 0 : index
    %16 = vector.load %arg9[%c0_12, %c0_13] : memref<64x256xbf16, #tpu.memory_space<vmem>>, vector<64x256xbf16>
    %cst_14 = arith.constant dense<0.000000e+00> : vector<16x256xf32>
    %17 = tpu.matmul %15, %16, %cst_14 {dimension_numbers = #tpu.dot_dimension_numbers<[1], [0], [0], [1], [0, 0, 1, 1], [], []>} : vector<16x64xbf16>, vector<64x256xbf16>, vector<16x256xf32> -> vector<16x256xf32>
    %c0_15 = arith.constant 0 : index
    %c0_16 = arith.constant 0 : index
    %18 = vector.load %arg7[%c0_15, %c0_16] : memref<16x4xbf16, #tpu.memory_space<vmem>>, vector<16x4xbf16>
    %c0_17 = arith.constant 0 : index
    %c0_18 = arith.constant 0 : index
    %c0_19 = arith.constant 0 : index
    %19 = vector.load %arg3[%c0_17, %c0_18, %c0_19] : memref<1x4x256xbf16, #tpu.memory_space<vmem>>, vector<1x4x256xbf16>
    %20 = vector.shape_cast %19 : vector<1x4x256xbf16> to vector<4x256xbf16>
    %cst_20 = arith.constant dense<0.000000e+00> : vector<16x256xf32>
    %21 = tpu.matmul %18, %20, %cst_20 {dimension_numbers = #tpu.dot_dimension_numbers<[1], [0], [0], [1], [0, 0, 1, 1], [], []>} : vector<16x4xbf16>, vector<4x256xbf16>, vector<16x256xf32> -> vector<16x256xf32>
    %22 = arith.addf %17, %21 : vector<16x256xf32>
    %23 = arith.truncf %22 : vector<16x256xf32> to vector<16x256xbf16>
    %c0_21 = arith.constant 0 : index
    %c0_22 = arith.constant 0 : index
    %c0_23 = arith.constant 0 : index
    %24 = vector.load %arg10[%c0_21, %c0_22, %c0_23] : memref<1x16x256xbf16, #tpu.memory_space<vmem>>, vector<1x16x256xbf16>
    %25 = vector.shape_cast %24 : vector<1x16x256xbf16> to vector<16x256xbf16>
    %26 = vector.shape_cast %23 : vector<16x256xbf16> to vector<1x16x256xbf16>
    tpu.vector_store %arg10[%c0_21, %c0_22, %c0_23], %26 {strides = array<i32>} : memref<1x16x256xbf16, #tpu.memory_space<vmem>>, vector<1x16x256xbf16>,
    return
  }
  func.func @transform_0(%arg0: i32, %arg1: i32) -> (i32, i32, i32) {
    %c0_i32 = arith.constant 0 : i32
    %c0_i32_0 = arith.constant 0 : i32
    return %arg0, %c0_i32, %arg1 : i32, i32, i32
  }
  func.func @transform_1(%arg0: i32, %arg1: i32) -> (i32, i32, i32) {
    %c0_i32 = arith.constant 0 : i32
    %c0_i32_0 = arith.constant 0 : i32
    return %arg0, %c0_i32, %arg1 : i32, i32, i32
  }
  func.func @transform_2(%arg0: i32, %arg1: i32) -> (i32, i32) {
    %c0_i32 = arith.constant 0 : i32
    %c0_i32_0 = arith.constant 0 : i32
    %c0_i32_1 = arith.constant 0 : i32
    return %c0_i32, %c0_i32_0 : i32, i32
  }
  func.func @transform_3(%arg0: i32, %arg1: i32) -> (i32, i32) {
    %c0_i32 = arith.constant 0 : i32
    %c0_i32_0 = arith.constant 0 : i32
    %c0_i32_1 = arith.constant 0 : i32
    return %c0_i32, %c0_i32_0 : i32, i32
  }
  func.func @transform_4(%arg0: i32, %arg1: i32) -> (i32, i32) {
    %c0_i32 = arith.constant 0 : i32
    %c0_i32_0 = arith.constant 0 : i32
    %c0_i32_1 = arith.constant 0 : i32
    return %c0_i32, %c0_i32_0 : i32, i32
  }
  func.func @transform_5(%arg0: i32, %arg1: i32) -> (i32, i32) {
    %c0_i32 = arith.constant 0 : i32
    %c0_i32_0 = arith.constant 0 : i32
    %c0_i32_1 = arith.constant 0 : i32
    return %c0_i32, %c0_i32_0 : i32, i32
  }
  func.func @transform_6(%arg0: i32, %arg1: i32) -> (i32, i32) {
    %c0_i32 = arith.constant 0 : i32
    %c0_i32_0 = arith.constant 0 : i32
    %c0_i32_1 = arith.constant 0 : i32
    return %c0_i32, %c0_i32_0 : i32, i32
  }
  func.func @transform_7(%arg0: i32, %arg1: i32) -> (i32, i32) {
    %c0_i32 = arith.constant 0 : i32
    %c0_i32_0 = arith.constant 0 : i32
    %c0_i32_1 = arith.constant 0 : i32
    return %c0_i32, %c0_i32_0 : i32, i32
  }
  func.func @transform_8(%arg0: i32, %arg1: i32) -> (i32, i32, i32) {
    %c0_i32 = arith.constant 0 : i32
    %c0_i32_0 = arith.constant 0 : i32
    return %arg0, %c0_i32, %arg1 : i32, i32, i32
  }
}

</mosaic_0001>

<llo_original>
// kernel: _combine_forward.1
$region0: #{_combine_forward.1}
  #allocation0 [shape = 'u32[]', space=smem, size = 0x4, offset = 0x4, fixed_abs, tag = 'smem constant byte address 0x4 - core index']
  #allocation1 [shape = 'u32[144,128]{1,0:T(1,128)}', space=vmem, size = 0x12000, scoped, tag = 'internal scratch']
  %s0 = inlined_call_operand.vmem [shape: bf16[2,8,64], index: 0, kind: input, shape index: {}]
  %s1 = inlined_call_operand.vmem [shape: bf16[2,4,256], index: 1, kind: input, shape index: {}]
  %s2 = inlined_call_operand.vmem [shape: bf16[4,8], index: 2, kind: input, shape index: {}]
  %s3 = inlined_call_operand.vmem [shape: f32[4,1], index: 3, kind: input, shape index: {}]
  %s4 = inlined_call_operand.vmem [shape: bf16[16,4], index: 4, kind: input, shape index: {}]
  %s5 = inlined_call_operand.vmem [shape: bf16[16,4], index: 5, kind: input, shape index: {}]
  %s6 = inlined_call_operand.vmem [shape: f32[16,1], index: 6, kind: input, shape index: {}]
  %s7 = inlined_call_operand.vmem [shape: bf16[64,256], index: 7, kind: input, shape index: {}]
  %s8 = inlined_call_operand.vmem [shape: bf16[2,16,256], index: 8, kind: output, shape index: {}]
  %s9 = sld [smem:[#allocation0]]
  $region65: #{_combine_forward.1} parent=0
    _
  %s11 = ssub.s32 1, %s9
  %s12 = scalar_select 0, %s11, %s9
  loop: start=0, step=1, limit=4
  $region2: #{_combine_forward.1} parent=0 // loop_pre_header
    _
  $region3: #{_combine_forward.1} parent=0 // loop_header
    %s14 = sphi 0, %s18
    %p15 = scmp.ge.s32.totalorder %s14, 4
    %s21 = sphi 0, %s33
    %s22 = sphi 0, %s29
    %s23 = sphi 0, %s21
    %s24 = sphi 0, %s22
    %s25 = sphi 0, %s23
    %s26 = sphi 0, %s24
    %s38 = sphi 0, %s40
    %s41 = sphi 0, %s38
    %s42 = sphi 0, %s41
    %s58 = sphi 0, %s42
    %s66 = sphi 0, %s68
    %s69 = sphi 0, %s66
    %s70 = sphi 0, %s69
    %s86 = sphi 0, %s70
    %s90 = sphi 0, %s90
    %s92 = sphi 0, %s90
    %s93 = sphi 0, %s92
    %s107 = sphi 0, %s93
    %s111 = sphi 0, %s111
    %s113 = sphi 0, %s111
    %s114 = sphi 0, %s113
    %s128 = sphi 0, %s114
    %s132 = sphi 0, %s132
    %s134 = sphi 0, %s132
    %s135 = sphi 0, %s134
    %s149 = sphi 0, %s135
    %s153 = sphi 0, %s153
    %s155 = sphi 0, %s153
    %s156 = sphi 0, %s155
    %s170 = sphi 0, %s156
    %s174 = sphi 0, %s174
    %s176 = sphi 0, %s174
    %s177 = sphi 0, %s176
    %s191 = sphi 0, %s177
    %s195 = sphi 0, %s195
    %s197 = sphi 0, %s195
    %s198 = sphi 0, %s197
    %s212 = sphi 0, %s198
    %s220 = sphi 0, %s222
    %s223 = sphi 0, %s220
    %s224 = sphi 0, %s223
    %s240 = sphi 0, %s224
  $region4: #{_combine_forward.1} parent=0 // loop_header_branch
    %17 = sbr.rel (%p15) target = $region8
  $region5: #{_combine_forward.1} parent=0 // loop_body
    %s19 = ssub.s32 %s14, 1
    %s20 = ssub.s32 %s14, 2
    %s27 = sadd.s32 1, %s22
    %p28 = scmp.ge.s32.totalorder %s27, 1
    %s29 = scalar_select %p28, 0, %s27
    %s30 = sadd.s32 1, %s21
    %s31 = scalar_select %p28, %s30, %s21
    %p32 = scmp.ge.s32.totalorder %s31, 2
    %s33 = scalar_select %p32, 0, %s31
    %s34 = ssub.s32 %s21, %s33
    %s35 = ssub.s32 %s22, %s29
    %s36 = sor.u32 %s34, %s35
    %p37 = scmp.eq.s32.totalorder %s36, 0
    %s39 = sadd.s32 %s38, 1
    %s40 = scalar_select %p37, %s38, %s39
    %p43 = pneg %p37
    %p44 = scmp.eq.s32.totalorder %s14, 1
    %p45 = por %p43, %p44
    %p46 = scmp.ne.s32.totalorder %s38, %s41
    %p47 = scmp.eq.s32.totalorder %s14, 0
    %p48 = por %p46, %p47
    %p49 = scmp.ne.s32.totalorder %s38, %s41
    %p50 = scmp.eq.s32.totalorder %s19, 1
    %p51 = por %p49, %p50
    %p52 = scmp.ne.s32.totalorder %s41, %s42
    %p53 = scmp.eq.s32.totalorder %s19, 0
    %p54 = por %p52, %p53
    %p55 = scmp.ne.s32.totalorder %s41, %s42
    %p56 = scmp.eq.s32.totalorder %s20, 1
    %p57 = por %p55, %p56
    %p59 = scmp.ne.s32.totalorder %s42, %s58
    %p60 = scmp.eq.s32.totalorder %s20, 0
    %p61 = por %p59, %p60
    %s62 = ssub.s32 %s21, %s33
    %s63 = ssub.s32 %s22, %s29
    %s64 = sor.u32 %s62, %s63
    %p65 = scmp.eq.s32.totalorder %s64, 0
    %s67 = sadd.s32 %s66, 1
    %s68 = scalar_select %p65, %s66, %s67
    %p71 = pneg %p65
    %p72 = scmp.eq.s32.totalorder %s14, 1
    %p73 = por %p71, %p72
    %p74 = scmp.ne.s32.totalorder %s66, %s69
    %p75 = scmp.eq.s32.totalorder %s14, 0
    %p76 = por %p74, %p75
    %p77 = scmp.ne.s32.totalorder %s66, %s69
    %p78 = scmp.eq.s32.totalorder %s19, 1
    %p79 = por %p77, %p78
    %p80 = scmp.ne.s32.totalorder %s69, %s70
    %p81 = scmp.eq.s32.totalorder %s19, 0
    %p82 = por %p80, %p81
    %p83 = scmp.ne.s32.totalorder %s69, %s70
    %p84 = scmp.eq.s32.totalorder %s20, 1
    %p85 = por %p83, %p84
    %p87 = scmp.ne.s32.totalorder %s70, %s86
    %p88 = scmp.eq.s32.totalorder %s20, 0
    %p89 = por %p87, %p88
    %s91 = sadd.s32 %s90, 1
    %p94 = scmp.eq.s32.totalorder %s14, 1
    %p95 = scmp.ne.s32.totalorder %s90, %s92
    %p96 = scmp.eq.s32.totalorder %s14, 0
    %p97 = por %p95, %p96
    %p98 = scmp.ne.s32.totalorder %s90, %s92
    %p99 = scmp.eq.s32.totalorder %s19, 1
    %p100 = por %p98, %p99
    %p101 = scmp.ne.s32.totalorder %s92, %s93
    %p102 = scmp.eq.s32.totalorder %s19, 0
    %p103 = por %p101, %p102
    %p104 = scmp.ne.s32.totalorder %s92, %s93
    %p105 = scmp.eq.s32.totalorder %s20, 1
    %p106 = por %p104, %p105
    %p108 = scmp.ne.s32.totalorder %s93, %s107
    %p109 = scmp.eq.s32.totalorder %s20, 0
    %p110 = por %p108, %p109
    %s112 = sadd.s32 %s111, 1
    %p115 = scmp.eq.s32.totalorder %s14, 1
    %p116 = scmp.ne.s32.totalorder %s111, %s113
    %p117 = scmp.eq.s32.totalorder %s14, 0
    %p118 = por %p116, %p117
    %p119 = scmp.ne.s32.totalorder %s111, %s113
    %p120 = scmp.eq.s32.totalorder %s19, 1
    %p121 = por %p119, %p120
    %p122 = scmp.ne.s32.totalorder %s113, %s114
    %p123 = scmp.eq.s32.totalorder %s19, 0
    %p124 = por %p122, %p123
    %p125 = scmp.ne.s32.totalorder %s113, %s114
    %p126 = scmp.eq.s32.totalorder %s20, 1
    %p127 = por %p125, %p126
    %p129 = scmp.ne.s32.totalorder %s114, %s128
    %p130 = scmp.eq.s32.totalorder %s20, 0
    %p131 = por %p129, %p130
    %s133 = sadd.s32 %s132, 1
    %p136 = scmp.eq.s32.totalorder %s14, 1
    %p137 = scmp.ne.s32.totalorder %s132, %s134
    %p138 = scmp.eq.s32.totalorder %s14, 0
    %p139 = por %p137, %p138
    %p140 = scmp.ne.s32.totalorder %s132, %s134
    %p141 = scmp.eq.s32.totalorder %s19, 1
    %p142 = por %p140, %p141
    %p143 = scmp.ne.s32.totalorder %s134, %s135
    %p144 = scmp.eq.s32.totalorder %s19, 0
    %p145 = por %p143, %p144
    %p146 = scmp.ne.s32.totalorder %s134, %s135
    %p147 = scmp.eq.s32.totalorder %s20, 1
    %p148 = por %p146, %p147
    %p150 = scmp.ne.s32.totalorder %s135, %s149
    %p151 = scmp.eq.s32.totalorder %s20, 0
    %p152 = por %p150, %p151
    %s154 = sadd.s32 %s153, 1
    %p157 = scmp.eq.s32.totalorder %s14, 1
    %p158 = scmp.ne.s32.totalorder %s153, %s155
    %p159 = scmp.eq.s32.totalorder %s14, 0
    %p160 = por %p158, %p159
    %p161 = scmp.ne.s32.totalorder %s153, %s155
    %p162 = scmp.eq.s32.totalorder %s19, 1
    %p163 = por %p161, %p162
    %p164 = scmp.ne.s32.totalorder %s155, %s156
    %p165 = scmp.eq.s32.totalorder %s19, 0
    %p166 = por %p164, %p165
    %p167 = scmp.ne.s32.totalorder %s155, %s156
    %p168 = scmp.eq.s32.totalorder %s20, 1
    %p169 = por %p167, %p168
    %p171 = scmp.ne.s32.totalorder %s156, %s170
    %p172 = scmp.eq.s32.totalorder %s20, 0
    %p173 = por %p171, %p172
    %s175 = sadd.s32 %s174, 1
    %p178 = scmp.eq.s32.totalorder %s14, 1
    %p179 = scmp.ne.s32.totalorder %s174, %s176
    %p180 = scmp.eq.s32.totalorder %s14, 0
    %p181 = por %p179, %p180
    %p182 = scmp.ne.s32.totalorder %s174, %s176
    %p183 = scmp.eq.s32.totalorder %s19, 1
    %p184 = por %p182, %p183
    %p185 = scmp.ne.s32.totalorder %s176, %s177
    %p186 = scmp.eq.s32.totalorder %s19, 0
    %p187 = por %p185, %p186
    %p188 = scmp.ne.s32.totalorder %s176, %s177
    %p189 = scmp.eq.s32.totalorder %s20, 1
    %p190 = por %p188, %p189
    %p192 = scmp.ne.s32.totalorder %s177, %s191
    %p193 = scmp.eq.s32.totalorder %s20, 0
    %p194 = por %p192, %p193
    %s196 = sadd.s32 %s195, 1
    %p199 = scmp.eq.s32.totalorder %s14, 1
    %p200 = scmp.ne.s32.totalorder %s195, %s197
    %p201 = scmp.eq.s32.totalorder %s14, 0
    %p202 = por %p200, %p201
    %p203 = scmp.ne.s32.totalorder %s195, %s197
    %p204 = scmp.eq.s32.totalorder %s19, 1
    %p205 = por %p203, %p204
    %p206 = scmp.ne.s32.totalorder %s197, %s198
    %p207 = scmp.eq.s32.totalorder %s19, 0
    %p208 = por %p206, %p207
    %p209 = scmp.ne.s32.totalorder %s197, %s198
    %p210 = scmp.eq.s32.totalorder %s20, 1
    %p211 = por %p209, %p210
    %p213 = scmp.ne.s32.totalorder %s198, %s212
    %p214 = scmp.eq.s32.totalorder %s20, 0
    %p215 = por %p213, %p214
    %s216 = ssub.s32 %s21, %s33
    %s217 = ssub.s32 %s22, %s29
    %s218 = sor.u32 %s216, %s217
    %p219 = scmp.eq.s32.totalorder %s218, 0
    %s221 = sadd.s32 %s220, 1
    %s222 = scalar_select %p219, %s220, %s221
    %p225 = pneg %p219
    %p226 = scmp.eq.s32.totalorder %s14, 1
    %p227 = por %p225, %p226
    %p228 = scmp.ne.s32.totalorder %s220, %s223
    %p229 = scmp.eq.s32.totalorder %s14, 0
    %p230 = por %p228, %p229
    %p231 = scmp.ne.s32.totalorder %s220, %s223
    %p232 = scmp.eq.s32.totalorder %s19, 1
    %p233 = por %p231, %p232
    %p234 = scmp.ne.s32.totalorder %s223, %s224
    %p235 = scmp.eq.s32.totalorder %s19, 0
    %p236 = por %p234, %p235
    %p237 = scmp.ne.s32.totalorder %s223, %s224
    %p238 = scmp.eq.s32.totalorder %s20, 1
    %p239 = por %p237, %p238
    %p241 = scmp.ne.s32.totalorder %s224, %s240
    %p242 = scmp.eq.s32.totalorder %s20, 0
    %p243 = por %p241, %p242
    %p244 = scmp.le.s32.totalorder 1, %s14
    %p245 = scmp.lt.s32.totalorder %s14, 3
    %p246 = pnand %p244, %p245
    %p247 = pneg %p246
    // Predicated region
    $region9: #{_combine_forward.1} parent=5 // pred_check
      _
    $region10: #{_combine_forward.1} parent=5 // pred_check_branch
      %249 = sbr.rel (%p246) target = $region12
    $region11: #{_combine_forward.1} parent=5 // pred_region
      %s250 = ssub.s32 %s14, 1
      // Predicated region
      $region13: #{_combine_forward.1} parent=11 // pred_check
        %p251 = pneg %p103
      $region14: #{_combine_forward.1} parent=11 // pred_check_branch
        %253 = sbr.rel (%p251) target = $region16
      $region15: #{_combine_forward.1} parent=11 // pred_region
        _
      $region16: #{_combine_forward.1} parent=11 // pred_fallthru
        _
      // Predicated region
      $region17: #{_combine_forward.1} parent=11 // pred_check
        %p254 = pneg %p124
      $region18: #{_combine_forward.1} parent=11 // pred_check_branch
        %256 = sbr.rel (%p254) target = $region20
      $region19: #{_combine_forward.1} parent=11 // pred_region
        _
      $region20: #{_combine_forward.1} parent=11 // pred_fallthru
        _
      // Predicated region
      $region21: #{_combine_forward.1} parent=11 // pred_check
        %p257 = pneg %p145
      $region22: #{_combine_forward.1} parent=11 // pred_check_branch
        %259 = sbr.rel (%p257) target = $region24
      $region23: #{_combine_forward.1} parent=11 // pred_region
        _
      $region24: #{_combine_forward.1} parent=11 // pred_fallthru
        _
      // Predicated region
      $region25: #{_combine_forward.1} parent=11 // pred_check
        %p260 = pneg %p166
      $region26: #{_combine_forward.1} parent=11 // pred_check_branch
        %262 = sbr.rel (%p260) target = $region28
      $region27: #{_combine_forward.1} parent=11 // pred_region
        _
      $region28: #{_combine_forward.1} parent=11 // pred_fallthru
        _
      // Predicated region
      $region29: #{_combine_forward.1} parent=11 // pred_check
        %p263 = pneg %p187
      $region30: #{_combine_forward.1} parent=11 // pred_check_branch
        %265 = sbr.rel (%p263) target = $region32
      $region31: #{_combine_forward.1} parent=11 // pred_region
        _
      $region32: #{_combine_forward.1} parent=11 // pred_fallthru
        _
      // Predicated region
      $region33: #{_combine_forward.1} parent=11 // pred_check
        %p266 = pneg %p208
      $region34: #{_combine_forward.1} parent=11 // pred_check_branch
        %268 = sbr.rel (%p266) target = $region36
      $region35: #{_combine_forward.1} parent=11 // pred_region
        _
      $region36: #{_combine_forward.1} parent=11 // pred_fallthru
        _
    $region12: #{_combine_forward.1} parent=5 // pred_fallthru
      _
    %p269 = scmp.lt.s32.totalorder %s14, 2
    // Predicated region
    $region37: #{_combine_forward.1} parent=5 // pred_check
      %p270 = pneg %p269
    $region38: #{_combine_forward.1} parent=5 // pred_check_branch
      %272 = sbr.rel (%p270) target = $region40
    $region39: #{_combine_forward.1} parent=5 // pred_region
      // Predicated region
      $region41: #{_combine_forward.1} parent=39 // pred_check
        %p273 = pneg %p48
      $region42: #{_combine_forward.1} parent=39 // pred_check_branch
        %275 = sbr.rel (%p273) target = $region44
      $region43: #{_combine_forward.1} parent=39 // pred_region
        %p276 = scmp.lt.s32.totalorder %s21, 1
        %s277 = scalar_select %p276, %s21, 1
        %p278 = scmp.lt.s32.totalorder %s22, 0
        %s279 = scalar_select %p278, %s22, 0
        %s280 = sadd.s32 %s279, %s277
        %s281 = smul.addr %s280, 4
        %s282 = scalar_lea.vmem %s0, %s281
      $region44: #{_combine_forward.1} parent=39 // pred_fallthru
        _
      // Predicated region
      $region45: #{_combine_forward.1} parent=39 // pred_check
        %p283 = pneg %p76
      $region46: #{_combine_forward.1} parent=39 // pred_check_branch
        %285 = sbr.rel (%p283) target = $region48
      $region47: #{_combine_forward.1} parent=39 // pred_region
        %s286 = smul.u32 2, %s22
        %p287 = scmp.lt.s32.totalorder %s21, 1
        %s288 = scalar_select %p287, %s21, 1
        %p289 = scmp.lt.s32.totalorder %s286, 1
        %s290 = scalar_select %p289, %s286, 1
        %s291 = smul.addr %s288, 2
        %s292 = sadd.s32 %s290, %s291
        %s293 = smul.addr %s292, 2
        %s294 = scalar_lea.vmem %s1, %s293
        %s295 = smul.u32 2, %s22
      $region48: #{_combine_forward.1} parent=39 // pred_fallthru
        _
    $region40: #{_combine_forward.1} parent=5 // pred_fallthru
      _
    %p296 = scmp.le.s32.totalorder 1, %s14
    %p297 = scmp.lt.s32.totalorder %s14, 3
    %p298 = pnand %p296, %p297
    %p299 = pneg %p298
    // Predicated region
    $region49: #{_combine_forward.1} parent=5 // pred_check
      _
    $region50: #{_combine_forward.1} parent=5 // pred_check_branch
      %301 = sbr.rel (%p298) target = $region52
    $region51: #{_combine_forward.1} parent=5 // pred_region
      %s302 = ssub.s32 %s14, 1
      %p303 = scmp.lt.s32.totalorder %s23, 1
      %s304 = scalar_select %p303, %s23, 1
      %p305 = scmp.lt.s32.totalorder %s24, 0
      %s306 = scalar_select %p305, %s24, 0
      %s307 = sadd.s32 %s306, %s304
      %s308 = smul.addr %s307, 4
      %s309 = scalar_lea.vmem %s0, %s308
      %p310 = pneg %p54
      %p311 = pneg %p51
      %s312 = smul.u32 2, %s24
      %p313 = scmp.lt.s32.totalorder %s23, 1
      %s314 = scalar_select %p313, %s23, 1
      %p315 = scmp.lt.s32.totalorder %s312, 1
      %s316 = scalar_select %p315, %s312, 1
      %s317 = smul.addr %s314, 2
      %s318 = sadd.s32 %s316, %s317
      %s319 = smul.addr %s318, 2
      %s320 = scalar_lea.vmem %s1, %s319
      %p321 = pneg %p82
      %p322 = pneg %p79
      %p323 = pneg %p103
      %p324 = pneg %p100
      %p325 = pneg %p124
      %p326 = pneg %p121
      %p327 = pneg %p145
      %p328 = pneg %p142
      %p329 = pneg %p166
      %p330 = pneg %p163
      %p331 = pneg %p187
      %p332 = pneg %p184
      %p333 = pneg %p208
      %p334 = pneg %p205
      %p335 = pneg %p236
      %p336 = pneg %p233
      %s337 = smul.u32 2, %s24
      %p338 = scmp.lt.s32.totalorder %s23, 1
      %s339 = scalar_select %p338, %s23, 1
      %p340 = scmp.lt.s32.totalorder %s337, 1
      %s341 = scalar_select %p340, %s337, 1
      %s342 = smul.addr %s339, 4
      %s343 = sadd.s32 %s341, %s342
      %s344 = smul.addr %s343, 4
      %s345 = scalar_lea.vmem %s8, %s344
      %p346 = scmp.lt.s32.totalorder %s23, 1
      %s347 = scalar_select %p346, %s23, 1
      %p348 = scmp.lt.s32.totalorder %s24, 0
      %s349 = scalar_select %p348, %s24, 0
      %s350 = sadd.s32 %s349, %s347
      %s351 = smul.addr %s350, 4
      %s352 = scalar_lea.vmem %s0, %s351
      %s353 = smul.u32 2, %s24
      %p354 = scmp.lt.s32.totalorder %s23, 1
      %s355 = scalar_select %p354, %s23, 1
      %p356 = scmp.lt.s32.totalorder %s353, 1
      %s357 = scalar_select %p356, %s353, 1
      %s358 = smul.addr %s355, 2
      %s359 = sadd.s32 %s357, %s358
      %s360 = smul.addr %s359, 2
      %s361 = scalar_lea.vmem %s1, %s360
      %s362 = smul.u32 2, %s24
      %s363 = smul.u32 2, %s24
      %p364 = scmp.lt.s32.totalorder %s23, 1
      %s365 = scalar_select %p364, %s23, 1
      %p366 = scmp.lt.s32.totalorder %s363, 1
      %s367 = scalar_select %p366, %s363, 1
      %s368 = smul.addr %s365, 4
      %s369 = sadd.s32 %s367, %s368
      %s370 = smul.addr %s369, 4
      %s371 = scalar_lea.vmem %s8, %s370
      %s372 = smul.u32 2, %s24
      %v374 = vld [vmem:[%s352] sm:$0xf]
      %v375 = vld [vmem:[%s2] sm:$0x3]
      %v376 = vld [vmem:[%s3] sm:$0xf]
      %378 = vset.pattern.permute.xlu0 0
      %379 = vperm.xlu0 %378, %v376
      %v380 = vpop.permute.xlu0 %379
      %vm382 = vcmask 64512
      %v384 = vsel %vm382, %v375, 0
      %vm386 = vcmask 1043456
      %v388 = vsel %vm386, %v374, 0
      %390 = vmatprep.subr.bf16.mxu0 0
      %391 = vmatpush1.bf16.msra.mxu0 %v388
      %392 = vmatprep.subr.bf16.mxu0 0
      %393 = vmatpush1.bf16.msra.mxu0 0
      %394 = vmatprep.subr.bf16.mxu0 0
      %395 = vmatpush1.bf16.msra.mxu0 0
      %396 = vmatprep.subr.bf16.mxu0 0
      %397 = vmatpush1.bf16.msra.mxu0 0
      %398 = vmatprep.subr.bf16.mxu0 0
      %399 = vmatpush1.bf16.msra.mxu0 0
      %400 = vmatprep.subr.bf16.mxu0 0
      %401 = vmatpush1.bf16.msra.mxu0 0
      %402 = vmatprep.subr.bf16.mxu0 0
      %403 = vmatpush1.bf16.msra.mxu0 0
      %404 = vmatprep.subr.bf16.mxu0 0
      %405 = vmatpush1.bf16.msra.mxu0 0
      %406 = vmatprep.subr.bf16.mxu0 0
      %407 = vmatpush1.bf16.msra.mxu0 0
      %408 = vmatprep.subr.bf16.mxu0 0
      %409 = vmatpush1.bf16.msra.mxu0 0
      %410 = vmatprep.subr.bf16.mxu0 0
      %411 = vmatpush1.bf16.msra.mxu0 0
      %412 = vmatprep.subr.bf16.mxu0 0
      %413 = vmatpush1.bf16.msra.mxu0 0
      %414 = vmatprep.subr.bf16.mxu0 0
      %415 = vmatpush1.bf16.msra.mxu0 0
      %416 = vmatprep.subr.bf16.mxu0 0
      %417 = vmatpush1.bf16.msra.mxu0 0
      %418 = vmatprep.subr.bf16.mxu0 0
      %419 = vmatpush1.bf16.msra.mxu0 0
      %420 = vmatprep.subr.bf16.mxu0 0
      %421 = vmatpush1.bf16.msra.mxu0 0
      %422 = vmatprep.mubr.bf16.mxu0 0
      %423 = vmatmul.mubr.bf16.gmra.mrb[0].mxu0 %v384
      %v424 = vpop.f32.mrb[0].mxu0
      %v425 = vadd.f32 %v380, %v424
      %v426 = vpop.f32.mrb[0].mxu0
      %v427 = vpop.f32.mrb[0].mxu0
      %v428 = vpop.f32.mrb[0].mxu0
      %429 = vdwg.mxu0
      %v430 = vmax.f32 %v425, 0.0
      %v431 = vpack.c.bf16 %v430, %v430
      %v432 = vld [vmem:[%s4] sm:$0xf]
      %v433 = vld [vmem:[%s4 + $0x4] sm:$0xf]
      %v434 = vld [vmem:[%s6] sm:$0xff]
      %v435 = vld [vmem:[%s6 + $0x8] sm:$0xff]
      %437 = vset.pattern.permute.xlu0 0
      %438 = vperm.xlu0 %437, %v434
      %v439 = vpop.permute.xlu0 %438
      %442 = vset.pattern.permute.xlu0 0
      %443 = vperm.xlu0 %442, %v435
      %v444 = vpop.permute.xlu0 %443
      %v448 = vunpack.c.l.b16 %v432
      %v449 = vunpack.c.l.b16 %v433
      %v450 = vpack.c.b16 %v449, %v448
      %vm451 = vcmask 31744
      %v453 = vsel %vm451, %v450, 0
      %vm455 = vcmask 1041408
      %v457 = vsel %vm455, %v431, 0
      %459 = vmatprep.subr.bf16.mxu0 0
      %460 = vmatpush1.bf16.msra.mxu0 %v457
      %461 = vmatprep.subr.bf16.mxu0 0
      %462 = vmatpush1.bf16.msra.mxu0 0
      %463 = vmatprep.subr.bf16.mxu0 0
      %464 = vmatpush1.bf16.msra.mxu0 0
      %465 = vmatprep.subr.bf16.mxu0 0
      %466 = vmatpush1.bf16.msra.mxu0 0
      %467 = vmatprep.subr.bf16.mxu0 0
      %468 = vmatpush1.bf16.msra.mxu0 0
      %469 = vmatprep.subr.bf16.mxu0 0
      %470 = vmatpush1.bf16.msra.mxu0 0
      %471 = vmatprep.subr.bf16.mxu0 0
      %472 = vmatpush1.bf16.msra.mxu0 0
      %473 = vmatprep.subr.bf16.mxu0 0
      %474 = vmatpush1.bf16.msra.mxu0 0
      %475 = vmatprep.subr.bf16.mxu0 0
      %476 = vmatpush1.bf16.msra.mxu0 0
      %477 = vmatprep.subr.bf16.mxu0 0
      %478 = vmatpush1.bf16.msra.mxu0 0
      %479 = vmatprep.subr.bf16.mxu0 0
      %480 = vmatpush1.bf16.msra.mxu0 0
      %481 = vmatprep.subr.bf16.mxu0 0
      %482 = vmatpush1.bf16.msra.mxu0 0
      %483 = vmatprep.subr.bf16.mxu0 0
      %484 = vmatpush1.bf16.msra.mxu0 0
      %485 = vmatprep.subr.bf16.mxu0 0
      %486 = vmatpush1.bf16.msra.mxu0 0
      %487 = vmatprep.subr.bf16.mxu0 0
      %488 = vmatpush1.bf16.msra.mxu0 0
      %489 = vmatprep.subr.bf16.mxu0 0
      %490 = vmatpush1.bf16.msra.mxu0 0
      %491 = vmatprep.mubr.bf16.mxu0 0
      %492 = vmatmul.mubr.bf16.gmra.mrb[0].mxu0 %v453
      %v493 = vpop.f32.mrb[0].mxu0
      %v494 = vadd.f32 %v439, %v493
      %v495 = vpop.f32.mrb[0].mxu0
      %v496 = vpop.f32.mrb[0].mxu0
      %v497 = vadd.f32 %v444, %v496
      %v498 = vpop.f32.mrb[0].mxu0
      %499 = vdwg.mxu0
      %v500 = vpack.c.bf16 %v497, %v494
      %v501 = vld [vmem:[%s7] sm:$0xff]
      %v502 = vld [vmem:[%s7 + $0x8] sm:$0xff]
      %v503 = vld [vmem:[%s7 + $0x10] sm:$0xff]
      %v504 = vld [vmem:[%s7 + $0x18] sm:$0xff]
      %v505 = vld [vmem:[%s7 + $0x20] sm:$0xff]
      %v506 = vld [vmem:[%s7 + $0x28] sm:$0xff]
      %v507 = vld [vmem:[%s7 + $0x30] sm:$0xff]
      %v508 = vld [vmem:[%s7 + $0x38] sm:$0xff]
      %v509 = vld [vmem:[%s5] sm:$0xf]
      %v510 = vld [vmem:[%s5 + $0x4] sm:$0xf]
      %v511 = vld [vmem:[%s361] sm:$0xf]
      %v514 = vunpack.c.l.b16 %v509
      %v515 = vunpack.c.l.b16 %v510
      %v516 = vpack.c.b16 %v515, %v514
      %v519 = vunpack.c.l.s4 1983009808
      %v520 = vunpack.c.0.s8 %v519
      %v521 = vlaneseq
      %v522 = vshrl.u32 %v521, 7
      %v523 = vsub.s32 %v520, %v522
      %v524 = vrot.slane %v511, %v523
      %v525 = vcombine.high %v524, %v524
      %v527 = vsel %vm451, %v516, 0
      %v530 = vsel %vm455, %v524, 0
      %v533 = vsel %vm455, %v525, 0
      %535 = vmatprep.subr.bf16.mxu0 %v533
      %536 = vmatpush1.bf16.msra.mxu0 %v530
      %537 = vmatprep.subr.bf16.mxu0 0
      %538 = vmatpush1.bf16.msra.mxu0 0
      %539 = vmatprep.subr.bf16.mxu0 0
      %540 = vmatpush1.bf16.msra.mxu0 0
      %541 = vmatprep.subr.bf16.mxu0 0
      %542 = vmatpush1.bf16.msra.mxu0 0
      %543 = vmatprep.subr.bf16.mxu0 0
      %544 = vmatpush1.bf16.msra.mxu0 0
      %545 = vmatprep.subr.bf16.mxu0 0
      %546 = vmatpush1.bf16.msra.mxu0 0
      %547 = vmatprep.subr.bf16.mxu0 0
      %548 = vmatpush1.bf16.msra.mxu0 0
      %549 = vmatprep.subr.bf16.mxu0 0
      %550 = vmatpush1.bf16.msra.mxu0 0
      %551 = vmatprep.subr.bf16.mxu0 0
      %552 = vmatpush1.bf16.msra.mxu0 0
      %553 = vmatprep.subr.bf16.mxu0 0
      %554 = vmatpush1.bf16.msra.mxu0 0
      %555 = vmatprep.subr.bf16.mxu0 0
      %556 = vmatpush1.bf16.msra.mxu0 0
      %557 = vmatprep.subr.bf16.mxu0 0
      %558 = vmatpush1.bf16.msra.mxu0 0
      %559 = vmatprep.subr.bf16.mxu0 0
      %560 = vmatpush1.bf16.msra.mxu0 0
      %561 = vmatprep.subr.bf16.mxu0 0
      %562 = vmatpush1.bf16.msra.mxu0 0
      %563 = vmatprep.subr.bf16.mxu0 0
      %564 = vmatpush1.bf16.msra.mxu0 0
      %565 = vmatprep.subr.bf16.mxu0 0
      %566 = vmatpush1.bf16.msra.mxu0 0
      %567 = vmatprep.mubr.bf16.mxu0 0
      %568 = vmatmul.mubr.bf16.gmra.mrb[0].mxu0 %v527
      %v569 = vpop.f32.mrb[0].mxu0
      %v570 = vadd.f32 0.0, %v569
      %v571 = vpop.f32.mrb[0].mxu0
      %v572 = vadd.f32 0.0, %v571
      %v573 = vpop.f32.mrb[0].mxu0
      %v574 = vadd.f32 0.0, %v573
      %v575 = vpop.f32.mrb[0].mxu0
      %v576 = vadd.f32 0.0, %v575
      %577 = vdwg.mxu0
      %v586 = vunpack.c.l.b16 %v501
      %v587 = vunpack.c.h.b16 %v501
      %v588 = vunpack.c.l.b16 %v502
      %v589 = vunpack.c.h.b16 %v502
      %v590 = vunpack.c.l.b16 %v503
      %v591 = vunpack.c.h.b16 %v503
      %v592 = vunpack.c.l.b16 %v504
      %v593 = vunpack.c.h.b16 %v504
      %v594 = vunpack.c.l.b16 %v505
      %v595 = vunpack.c.h.b16 %v505
      %v596 = vunpack.c.l.b16 %v506
      %v597 = vunpack.c.h.b16 %v506
      %v598 = vunpack.c.l.b16 %v507
      %v599 = vunpack.c.h.b16 %v507
      %v600 = vunpack.c.l.b16 %v508
      %v601 = vunpack.c.h.b16 %v508
      %v602 = vpack.c.b16 %v588, %v586
      %v603 = vpack.c.b16 %v589, %v587
      %v604 = vpack.c.b16 %v592, %v590
      %v605 = vpack.c.b16 %v593, %v591
      %v606 = vpack.c.b16 %v596, %v594
      %v607 = vpack.c.b16 %v597, %v595
      %v608 = vpack.c.b16 %v600, %v598
      %v609 = vpack.c.b16 %v601, %v599
      %vm618 = vcmask 523264
      %v620 = vsel %vm618, %v500, 0
      %622 = vmatprep.subr.bf16.mxu0 %v603
      %623 = vmatpush1.bf16.msra.mxu0 %v602
      %624 = vmatprep.subr.bf16.mxu0 %v605
      %625 = vmatpush1.bf16.msra.mxu0 %v604
      %626 = vmatprep.subr.bf16.mxu0 %v607
      %627 = vmatpush1.bf16.msra.mxu0 %v606
      %628 = vmatprep.subr.bf16.mxu0 %v609
      %629 = vmatpush1.bf16.msra.mxu0 %v608
      %630 = vmatprep.subr.bf16.mxu0 0
      %631 = vmatpush1.bf16.msra.mxu0 0
      %632 = vmatprep.subr.bf16.mxu0 0
      %633 = vmatpush1.bf16.msra.mxu0 0
      %634 = vmatprep.subr.bf16.mxu0 0
      %635 = vmatpush1.bf16.msra.mxu0 0
      %636 = vmatprep.subr.bf16.mxu0 0
      %637 = vmatpush1.bf16.msra.mxu0 0
      %638 = vmatprep.subr.bf16.mxu0 0
      %639 = vmatpush1.bf16.msra.mxu0 0
      %640 = vmatprep.subr.bf16.mxu0 0
      %641 = vmatpush1.bf16.msra.mxu0 0
      %642 = vmatprep.subr.bf16.mxu0 0
      %643 = vmatpush1.bf16.msra.mxu0 0
      %644 = vmatprep.subr.bf16.mxu0 0
      %645 = vmatpush1.bf16.msra.mxu0 0
      %646 = vmatprep.subr.bf16.mxu0 0
      %647 = vmatpush1.bf16.msra.mxu0 0
      %648 = vmatprep.subr.bf16.mxu0 0
      %649 = vmatpush1.bf16.msra.mxu0 0
      %650 = vmatprep.subr.bf16.mxu0 0
      %651 = vmatpush1.bf16.msra.mxu0 0
      %652 = vmatprep.subr.bf16.mxu0 0
      %653 = vmatpush1.bf16.msra.mxu0 0
      %654 = vmatprep.mubr.bf16.mxu0 0
      %655 = vmatmul.mubr.bf16.gmra.mrb[0].mxu0 %v620
      %v656 = vpop.f32.mrb[0].mxu0
      %v657 = vadd.f32 %v570, %v656
      %v658 = vpop.f32.mrb[0].mxu0
      %v659 = vadd.f32 %v572, %v658
      %v660 = vpop.f32.mrb[0].mxu0
      %v661 = vadd.f32 %v574, %v660
      %v662 = vpop.f32.mrb[0].mxu0
      %v663 = vadd.f32 %v576, %v662
      %664 = vdwg.mxu0
      %v665 = vpack.c.bf16 %v661, %v657
      %v666 = vpack.c.bf16 %v663, %v659
      %v669 = vunpack.c.l.b16 %v665
      %v670 = vunpack.c.l.b16 %v666
      %v671 = vunpack.c.h.b16 %v665
      %v672 = vunpack.c.h.b16 %v666
      %v673 = vpack.c.b16 %v670, %v669
      %v674 = vpack.c.b16 %v672, %v671
      %677 = vst [vmem:[%s371] sm:$0xff] %v673
      %678 = vst [vmem:[%s371 + $0x8] sm:$0xff] %v674
      %s679 = smul.u32 2, %s24
      %p680 = scmp.lt.s32.totalorder %s23, 1
      %s681 = scalar_select %p680, %s23, 1
      %p682 = scmp.lt.s32.totalorder %s679, 1
      %s683 = scalar_select %p682, %s679, 1
      %s684 = smul.addr %s681, 4
      %s685 = sadd.s32 %s683, %s684
      %s686 = smul.addr %s685, 4
      %s687 = scalar_lea.vmem %s8, %s686
      // Predicated region
      $region53: #{_combine_forward.1} parent=51 // pred_check
        %p688 = pneg %p233
      $region54: #{_combine_forward.1} parent=51 // pred_check_branch
        %690 = sbr.rel (%p688) target = $region56
      $region55: #{_combine_forward.1} parent=51 // pred_region
        %s691 = smul.u32 2, %s24
      $region56: #{_combine_forward.1} parent=51 // pred_fallthru
        _
    $region52: #{_combine_forward.1} parent=5 // pred_fallthru
      _
    %p692 = scmp.le.s32.totalorder 2, %s14
    // Predicated region
    $region57: #{_combine_forward.1} parent=5 // pred_check
      %p693 = pneg %p692
    $region58: #{_combine_forward.1} parent=5 // pred_check_branch
      %695 = sbr.rel (%p693) target = $region60
    $region59: #{_combine_forward.1} parent=5 // pred_region
      %s696 = ssub.s32 %s14, 2
      // Predicated region
      $region61: #{_combine_forward.1} parent=59 // pred_check
        %p697 = pneg %p239
      $region62: #{_combine_forward.1} parent=59 // pred_check_branch
        %699 = sbr.rel (%p697) target = $region64
      $region63: #{_combine_forward.1} parent=59 // pred_region
        %s700 = smul.u32 2, %s26
        %p701 = scmp.lt.s32.totalorder %s25, 1
        %s702 = scalar_select %p701, %s25, 1
        %p703 = scmp.lt.s32.totalorder %s700, 1
        %s704 = scalar_select %p703, %s700, 1
        %s705 = smul.addr %s702, 4
        %s706 = sadd.s32 %s704, %s705
        %s707 = smul.addr %s706, 4
        %s708 = scalar_lea.vmem %s8, %s707
      $region64: #{_combine_forward.1} parent=59 // pred_fallthru
        _
    $region60: #{_combine_forward.1} parent=5 // pred_fallthru
      _
  $region6: #{_combine_forward.1} parent=0 // loop_footer
    %s18 = sadd.s32 1, %s14
  $region7: #{_combine_forward.1} parent=0 // loop_footer_branch
    %13 = sbr.rel target = $region3
  $region8: #{_combine_forward.1} parent=0 // loop_exit
    _

</llo_original>
